<compile_context>
chip_gen: v6e
topology: v6e:2x2x1
jax: 0.10.0
libtpu: 0.0.40
codegen_flags: <defaults>
</compile_context>

<pallas_src>
import jax
import jax.numpy as jnp
from jax import lax
from jax.experimental import pallas as pl
from jax.experimental.pallas import tpu as pltpu

# ----------------------------------------------------------------------------
# Problem sizes (small, consistent with a tiny segmentation net)
# ----------------------------------------------------------------------------
B, CIN, H, W = 2, 4, 16, 16       # input image (NCHW): (2, 4, 16, 16)
CMID = 8                          # backbone feature channels
NCLS = 4                          # decode-head output classes

WP = W + 2                        # width after pad=1 on each side      (18)
NFLAT = H * WP                    # meaningful flat columns per image   (288)
NFLAT_AL = 384                    # lane-aligned columns per image (3 * 128)
LPAD = (H + 2) * WP               # flat length of the zero-padded image (324)
LPAD_AL = 512                     # lane-aligned padded flat length (4 * 128)
MAX_SHIFT = 2 * WP + 2            # largest im2col tap offset            (38)
assert MAX_SHIFT + NFLAT_AL <= LPAD_AL   # every im2col slice stays in-bounds
assert NFLAT <= NFLAT_AL


# ----------------------------------------------------------------------------
# Pallas kernel: one grid step == whole batch.
#   x_ref     : (B, CIN, LPAD_AL)      row-major-flattened zero-padded images
#   w1_ref    : (CMID, 9*CIN)          im2col weights of the 3x3 backbone conv
#                                      column index = (dy*3+dx)*CIN + c
#   b1_ref    : (CMID, 1)
#   w2_ref    : (NCLS, CMID)           1x1 decode-head weights
#   b2_ref    : (NCLS, 1)
#   o_ref     : (B, NCLS, NFLAT_AL)    logits on the aligned flat grid
#   patch_ref : (9*CIN, B*NFLAT_AL)    VMEM scratch: im2col patch matrix
#
# For output pixel q = h*WP + w (w < W), tap (dy, dx) reads flat index
# q + dy*WP + dx of the padded image, so each im2col row group is a contiguous
# lane-offset slice of the flattened image.  Columns with w >= W and columns
# >= NFLAT are harmless garbage and are sliced off in the wrapper.
# ----------------------------------------------------------------------------
def _segmentor_kernel(x_ref, w1_ref, b1_ref, w2_ref, b2_ref, o_ref, patch_ref):
    # Build the (36, 768) patch matrix for BOTH images (static unroll, tiny).
    for b in range(B):
        xb = x_ref[b]                                        # (CIN, LPAD_AL)
        col0 = b * NFLAT_AL                                  # lane-aligned
        for k in range(9):
            dy, dx = k // 3, k % 3
            s = dy * WP + dx
            patch_ref[k * CIN:(k + 1) * CIN, col0:col0 + NFLAT_AL] = \
                xb[:, s:s + NFLAT_AL]

    # backbone: single (CMID, 36) x (36, B*384) matmul + bias + ReLU
    feat = jnp.dot(w1_ref[...], patch_ref[...],
                   preferred_element_type=jnp.float32)
    feat = jnp.maximum(feat + b1_ref[...], 0.0)

    # decode head: single (NCLS, CMID) x (CMID, B*384) matmul + bias
    logits = jnp.dot(w2_ref[...], feat,
                     preferred_element_type=jnp.float32) + b2_ref[...]

    # lane-aligned, full-width vector stores (384 = 3 full vregs per row)
    for b in range(B):
        o_ref[b] = logits[:, b * NFLAT_AL:(b + 1) * NFLAT_AL].astype(o_ref.dtype)


@jax.jit
def segmentor_pallas(img_nchw, w1_oihw, b1, w2_oihw, b2):
    """img_nchw: (B, CIN, H, W) f32 -> (B, NCLS, H, W) f32 (NCHW in, NCHW out)."""
    # zero-pad directly in NCHW (no transposes): pad=1 for the 3x3 'same'
    # conv, then pad the flattened image to a lane-aligned length so every
    # im2col slice in the kernel is in-bounds and full-width.
    xp = jnp.pad(img_nchw, ((0, 0), (0, 0), (1, 1), (1, 1)))    # (B,CIN,H+2,WP)
    x_flat = xp.reshape(B, CIN, LPAD)                            # free reshape
    x_flat = jnp.pad(x_flat, ((0, 0), (0, 0), (0, LPAD_AL - LPAD)))

    # one-time tiny weight re-layouts to matmul form
    # w1_mat[m, (dy*3+dx)*CIN + c] = w1_oihw[m, c, dy, dx]
    w1_mat = jnp.transpose(w1_oihw, (0, 2, 3, 1)).reshape(CMID, 9 * CIN)
    w2_mat = w2_oihw.reshape(NCLS, CMID)
    b1_col = b1.reshape(CMID, 1)
    b2_col = b2.reshape(NCLS, 1)

    out = pl.pallas_call(
        _segmentor_kernel,
        out_shape=jax.ShapeDtypeStruct((B, NCLS, NFLAT_AL), jnp.float32),
        grid=(1,),                                   # single fused step
        in_specs=[
            pl.BlockSpec((B, CIN, LPAD_AL), lambda i: (0, 0, 0)),
            pl.BlockSpec((CMID, 9 * CIN), lambda i: (0, 0)),
            pl.BlockSpec((CMID, 1), lambda i: (0, 0)),
            pl.BlockSpec((NCLS, CMID), lambda i: (0, 0)),
            pl.BlockSpec((NCLS, 1), lambda i: (0, 0)),
        ],
        out_specs=pl.BlockSpec((B, NCLS, NFLAT_AL), lambda i: (0, 0, 0)),
        scratch_shapes=[pltpu.VMEM((9 * CIN, B * NFLAT_AL), jnp.float32)],
        compiler_params=pltpu.CompilerParams(
            dimension_semantics=("arbitrary",)),
    )(x_flat, w1_mat, b1_col, w2_mat, b2_col)

    # drop alignment garbage, reshape back to spatial, drop width-pad columns
    out = out[:, :, :NFLAT].reshape(B, NCLS, H, WP)[:, :, :, :W]
    return out


# ----------------------------------------------------------------------------
# Pure-JAX reference (same math, via lax.conv) for a correctness check
# ----------------------------------------------------------------------------
def segmentor_ref(img_nchw, w1_oihw, b1, w2_oihw, b2):
    feat = lax.conv_general_dilated(
        img_nchw, w1_oihw, window_strides=(1, 1), padding="SAME",
        dimension_numbers=("NCHW", "OIHW", "NCHW"))
    feat = jnp.maximum(feat + b1.reshape(1, CMID, 1, 1), 0.0)
    out = lax.conv_general_dilated(
        feat, w2_oihw, window_strides=(1, 1), padding="VALID",
        dimension_numbers=("NCHW", "OIHW", "NCHW"))
    return out + b2.reshape(1, NCLS, 1, 1)


if __name__ == "__main__":
    key = jax.random.PRNGKey(0)
    k_img, k_w1, k_b1, k_w2, k_b2 = jax.random.split(key, 5)

    img = jax.random.normal(k_img, (B, CIN, H, W), dtype=jnp.float32)
    # deterministic synthetic parameters (PyTorch-native OIHW layouts)
    w1 = jax.random.normal(k_w1, (CMID, CIN, 3, 3), dtype=jnp.float32) * 0.1
    b1 = jax.random.normal(k_b1, (CMID,), dtype=jnp.float32) * 0.1
    w2 = jax.random.normal(k_w2, (NCLS, CMID, 1, 1), dtype=jnp.float32) * 0.1
    b2 = jax.random.normal(k_b2, (NCLS,), dtype=jnp.float32) * 0.1

    out = jax.block_until_ready(segmentor_pallas(img, w1, b1, w2, b2))
    ref = jax.block_until_ready(segmentor_ref(img, w1, b1, w2, b2))

    assert out.shape == (B, NCLS, H, W), out.shape
    assert jnp.allclose(out, ref, atol=1e-4, rtol=1e-4), \
        float(jnp.max(jnp.abs(out - ref)))

    print("KERNEL_OK")
</pallas_src>

<mosaic_0001>
module attributes {stable_mosaic.version = 11 : i64} {
  func.func @_segmentor_kernel(%arg0: i32, %arg1: memref<2x4x512xf32, #tpu.memory_space<vmem>>, %arg2: memref<8x36xf32, #tpu.memory_space<vmem>>, %arg3: memref<8x1xf32, #tpu.memory_space<vmem>>, %arg4: memref<4x8xf32, #tpu.memory_space<vmem>>, %arg5: memref<4x1xf32, #tpu.memory_space<vmem>>, %arg6: memref<2x4x384xf32, #tpu.memory_space<vmem>>, %arg7: memref<36x768xf32, #tpu.memory_space<vmem>>) attributes {dimension_semantics = [#tpu.dimension_semantics<arbitrary>], iteration_bounds = array<i64: 1>, scalar_prefetch = 0 : i64, scratch_operands = 1 : i64, tpu.core_type = #tpu.core_type<tc>, window_params = [{pipeline_mode = #tpu.pipeline_mode<synchronous>, transform_indices = @transform_0, window_bounds = array<i64: 2, 4, 512>}, {pipeline_mode = #tpu.pipeline_mode<synchronous>, transform_indices = @transform_1, window_bounds = array<i64: 8, 36>}, {pipeline_mode = #tpu.pipeline_mode<synchronous>, transform_indices = @transform_2, window_bounds = array<i64: 8, 1>}, {pipeline_mode = #tpu.pipeline_mode<synchronous>, transform_indices = @transform_3, window_bounds = array<i64: 4, 8>}, {pipeline_mode = #tpu.pipeline_mode<synchronous>, transform_indices = @transform_4, window_bounds = array<i64: 4, 1>}, {pipeline_mode = #tpu.pipeline_mode<synchronous>, transform_indices = @transform_5, window_bounds = array<i64: 2, 4, 384>}]} {
    %c0 = arith.constant 0 : index
    %c0_0 = arith.constant 0 : index
    %c0_1 = arith.constant 0 : index
    %0 = vector.load %arg1[%c0, %c0_0, %c0_1] : memref<2x4x512xf32, #tpu.memory_space<vmem>>, vector<1x4x512xf32>
    %1 = vector.shape_cast %0 : vector<1x4x512xf32> to vector<4x512xf32>
    %2 = vector.extract_strided_slice %1 {offsets = [0, 0], sizes = [4, 384], strides = [1, 1]} : vector<4x512xf32> to vector<4x384xf32>
    %c0_2 = arith.constant 0 : index
    %c0_3 = arith.constant 0 : index
    %3 = vector.load %arg7[%c0_2, %c0_3] : memref<36x768xf32, #tpu.memory_space<vmem>>, vector<4x384xf32>
    tpu.vector_store %arg7[%c0_2, %c0_3], %2 {strides = array<i32>} : memref<36x768xf32, #tpu.memory_space<vmem>>, vector<4x384xf32>,
    %4 = vector.extract_strided_slice %1 {offsets = [0, 1], sizes = [4, 384], strides = [1, 1]} : vector<4x512xf32> to vector<4x384xf32>
    %c4 = arith.constant 4 : index
    %c0_4 = arith.constant 0 : index
    %5 = vector.load %arg7[%c4, %c0_4] : memref<36x768xf32, #tpu.memory_space<vmem>>, vector<4x384xf32>
    tpu.vector_store %arg7[%c4, %c0_4], %4 {strides = array<i32>} : memref<36x768xf32, #tpu.memory_space<vmem>>, vector<4x384xf32>,
    %6 = vector.extract_strided_slice %1 {offsets = [0, 2], sizes = [4, 384], strides = [1, 1]} : vector<4x512xf32> to vector<4x384xf32>
    %c8 = arith.constant 8 : index
    %c0_5 = arith.constant 0 : index
    %7 = vector.load %arg7[%c8, %c0_5] : memref<36x768xf32, #tpu.memory_space<vmem>>, vector<4x384xf32>
    tpu.vector_store %arg7[%c8, %c0_5], %6 {strides = array<i32>} : memref<36x768xf32, #tpu.memory_space<vmem>>, vector<4x384xf32>,
    %8 = vector.extract_strided_slice %1 {offsets = [0, 18], sizes = [4, 384], strides = [1, 1]} : vector<4x512xf32> to vector<4x384xf32>
    %c12 = arith.constant 12 : index
    %c0_6 = arith.constant 0 : index
    %9 = vector.load %arg7[%c12, %c0_6] : memref<36x768xf32, #tpu.memory_space<vmem>>, vector<4x384xf32>
    tpu.vector_store %arg7[%c12, %c0_6], %8 {strides = array<i32>} : memref<36x768xf32, #tpu.memory_space<vmem>>, vector<4x384xf32>,
    %10 = vector.extract_strided_slice %1 {offsets = [0, 19], sizes = [4, 384], strides = [1, 1]} : vector<4x512xf32> to vector<4x384xf32>
    %c16 = arith.constant 16 : index
    %c0_7 = arith.constant 0 : index
    %11 = vector.load %arg7[%c16, %c0_7] : memref<36x768xf32, #tpu.memory_space<vmem>>, vector<4x384xf32>
    tpu.vector_store %arg7[%c16, %c0_7], %10 {strides = array<i32>} : memref<36x768xf32, #tpu.memory_space<vmem>>, vector<4x384xf32>,
    %12 = vector.extract_strided_slice %1 {offsets = [0, 20], sizes = [4, 384], strides = [1, 1]} : vector<4x512xf32> to vector<4x384xf32>
    %c20 = arith.constant 20 : index
    %c0_8 = arith.constant 0 : index
    %13 = vector.load %arg7[%c20, %c0_8] : memref<36x768xf32, #tpu.memory_space<vmem>>, vector<4x384xf32>
    tpu.vector_store %arg7[%c20, %c0_8], %12 {strides = array<i32>} : memref<36x768xf32, #tpu.memory_space<vmem>>, vector<4x384xf32>,
    %14 = vector.extract_strided_slice %1 {offsets = [0, 36], sizes = [4, 384], strides = [1, 1]} : vector<4x512xf32> to vector<4x384xf32>
    %c24 = arith.constant 24 : index
    %c0_9 = arith.constant 0 : index
    %15 = vector.load %arg7[%c24, %c0_9] : memref<36x768xf32, #tpu.memory_space<vmem>>, vector<4x384xf32>
    tpu.vector_store %arg7[%c24, %c0_9], %14 {strides = array<i32>} : memref<36x768xf32, #tpu.memory_space<vmem>>, vector<4x384xf32>,
    %16 = vector.extract_strided_slice %1 {offsets = [0, 37], sizes = [4, 384], strides = [1, 1]} : vector<4x512xf32> to vector<4x384xf32>
    %c28 = arith.constant 28 : index
    %c0_10 = arith.constant 0 : index
    %17 = vector.load %arg7[%c28, %c0_10] : memref<36x768xf32, #tpu.memory_space<vmem>>, vector<4x384xf32>
    tpu.vector_store %arg7[%c28, %c0_10], %16 {strides = array<i32>} : memref<36x768xf32, #tpu.memory_space<vmem>>, vector<4x384xf32>,
    %18 = vector.extract_strided_slice %1 {offsets = [0, 38], sizes = [4, 384], strides = [1, 1]} : vector<4x512xf32> to vector<4x384xf32>
    %c32 = arith.constant 32 : index
    %c0_11 = arith.constant 0 : index
    %19 = vector.load %arg7[%c32, %c0_11] : memref<36x768xf32, #tpu.memory_space<vmem>>, vector<4x384xf32>
    tpu.vector_store %arg7[%c32, %c0_11], %18 {strides = array<i32>} : memref<36x768xf32, #tpu.memory_space<vmem>>, vector<4x384xf32>,
    %c1 = arith.constant 1 : index
    %c0_12 = arith.constant 0 : index
    %c0_13 = arith.constant 0 : index
    %20 = vector.load %arg1[%c1, %c0_12, %c0_13] : memref<2x4x512xf32, #tpu.memory_space<vmem>>, vector<1x4x512xf32>
    %21 = vector.shape_cast %20 : vector<1x4x512xf32> to vector<4x512xf32>
    %22 = vector.extract_strided_slice %21 {offsets = [0, 0], sizes = [4, 384], strides = [1, 1]} : vector<4x512xf32> to vector<4x384xf32>
    %c0_14 = arith.constant 0 : index
    %c384 = arith.constant 384 : index
    %23 = vector.load %arg7[%c0_14, %c384] : memref<36x768xf32, #tpu.memory_space<vmem>>, vector<4x384xf32>
    tpu.vector_store %arg7[%c0_14, %c384], %22 {strides = array<i32>} : memref<36x768xf32, #tpu.memory_space<vmem>>, vector<4x384xf32>,
    %24 = vector.extract_strided_slice %21 {offsets = [0, 1], sizes = [4, 384], strides = [1, 1]} : vector<4x512xf32> to vector<4x384xf32>
    %c4_15 = arith.constant 4 : index
    %c384_16 = arith.constant 384 : index
    %25 = vector.load %arg7[%c4_15, %c384_16] : memref<36x768xf32, #tpu.memory_space<vmem>>, vector<4x384xf32>
    tpu.vector_store %arg7[%c4_15, %c384_16], %24 {strides = array<i32>} : memref<36x768xf32, #tpu.memory_space<vmem>>, vector<4x384xf32>,
    %26 = vector.extract_strided_slice %21 {offsets = [0, 2], sizes = [4, 384], strides = [1, 1]} : vector<4x512xf32> to vector<4x384xf32>
    %c8_17 = arith.constant 8 : index
    %c384_18 = arith.constant 384 : index
    %27 = vector.load %arg7[%c8_17, %c384_18] : memref<36x768xf32, #tpu.memory_space<vmem>>, vector<4x384xf32>
    tpu.vector_store %arg7[%c8_17, %c384_18], %26 {strides = array<i32>} : memref<36x768xf32, #tpu.memory_space<vmem>>, vector<4x384xf32>,
    %28 = vector.extract_strided_slice %21 {offsets = [0, 18], sizes = [4, 384], strides = [1, 1]} : vector<4x512xf32> to vector<4x384xf32>
    %c12_19 = arith.constant 12 : index
    %c384_20 = arith.constant 384 : index
    %29 = vector.load %arg7[%c12_19, %c384_20] : memref<36x768xf32, #tpu.memory_space<vmem>>, vector<4x384xf32>
    tpu.vector_store %arg7[%c12_19, %c384_20], %28 {strides = array<i32>} : memref<36x768xf32, #tpu.memory_space<vmem>>, vector<4x384xf32>,
    %30 = vector.extract_strided_slice %21 {offsets = [0, 19], sizes = [4, 384], strides = [1, 1]} : vector<4x512xf32> to vector<4x384xf32>
    %c16_21 = arith.constant 16 : index
    %c384_22 = arith.constant 384 : index
    %31 = vector.load %arg7[%c16_21, %c384_22] : memref<36x768xf32, #tpu.memory_space<vmem>>, vector<4x384xf32>
    tpu.vector_store %arg7[%c16_21, %c384_22], %30 {strides = array<i32>} : memref<36x768xf32, #tpu.memory_space<vmem>>, vector<4x384xf32>,
    %32 = vector.extract_strided_slice %21 {offsets = [0, 20], sizes = [4, 384], strides = [1, 1]} : vector<4x512xf32> to vector<4x384xf32>
    %c20_23 = arith.constant 20 : index
    %c384_24 = arith.constant 384 : index
    %33 = vector.load %arg7[%c20_23, %c384_24] : memref<36x768xf32, #tpu.memory_space<vmem>>, vector<4x384xf32>
    tpu.vector_store %arg7[%c20_23, %c384_24], %32 {strides = array<i32>} : memref<36x768xf32, #tpu.memory_space<vmem>>, vector<4x384xf32>,
    %34 = vector.extract_strided_slice %21 {offsets = [0, 36], sizes = [4, 384], strides = [1, 1]} : vector<4x512xf32> to vector<4x384xf32>
    %c24_25 = arith.constant 24 : index
    %c384_26 = arith.constant 384 : index
    %35 = vector.load %arg7[%c24_25, %c384_26] : memref<36x768xf32, #tpu.memory_space<vmem>>, vector<4x384xf32>
    tpu.vector_store %arg7[%c24_25, %c384_26], %34 {strides = array<i32>} : memref<36x768xf32, #tpu.memory_space<vmem>>, vector<4x384xf32>,
    %36 = vector.extract_strided_slice %21 {offsets = [0, 37], sizes = [4, 384], strides = [1, 1]} : vector<4x512xf32> to vector<4x384xf32>
    %c28_27 = arith.constant 28 : index
    %c384_28 = arith.constant 384 : index
    %37 = vector.load %arg7[%c28_27, %c384_28] : memref<36x768xf32, #tpu.memory_space<vmem>>, vector<4x384xf32>
    tpu.vector_store %arg7[%c28_27, %c384_28], %36 {strides = array<i32>} : memref<36x768xf32, #tpu.memory_space<vmem>>, vector<4x384xf32>,
    %38 = vector.extract_strided_slice %21 {offsets = [0, 38], sizes = [4, 384], strides = [1, 1]} : vector<4x512xf32> to vector<4x384xf32>
    %c32_29 = arith.constant 32 : index
    %c384_30 = arith.constant 384 : index
    %39 = vector.load %arg7[%c32_29, %c384_30] : memref<36x768xf32, #tpu.memory_space<vmem>>, vector<4x384xf32>
    tpu.vector_store %arg7[%c32_29, %c384_30], %38 {strides = array<i32>} : memref<36x768xf32, #tpu.memory_space<vmem>>, vector<4x384xf32>,
    %c0_31 = arith.constant 0 : index
    %c0_32 = arith.constant 0 : index
    %40 = vector.load %arg2[%c0_31, %c0_32] : memref<8x36xf32, #tpu.memory_space<vmem>>, vector<8x36xf32>
    %c0_33 = arith.constant 0 : index
    %c0_34 = arith.constant 0 : index
    %41 = vector.load %arg7[%c0_33, %c0_34] : memref<36x768xf32, #tpu.memory_space<vmem>>, vector<36x768xf32>
    %cst = arith.constant dense<0.000000e+00> : vector<8x768xf32>
    %42 = tpu.matmul %40, %41, %cst {dimension_numbers = #tpu.dot_dimension_numbers<[1], [0], [0], [1], [0, 0, 1, 1], [], []>} : vector<8x36xf32>, vector<36x768xf32>, vector<8x768xf32> -> vector<8x768xf32>
    %c0_35 = arith.constant 0 : index
    %c0_36 = arith.constant 0 : index
    %43 = vector.load %arg3[%c0_35, %c0_36] : memref<8x1xf32, #tpu.memory_space<vmem>>, vector<8x1xf32>
    %44 = vector.broadcast %43 : vector<8x1xf32> to vector<8x768xf32>
    %45 = arith.addf %42, %44 : vector<8x768xf32>
    %cst_37 = arith.constant 0.000000e+00 : f32
    %46 = vector.broadcast %cst_37 : f32 to vector<8x768xf32>
    %47 = arith.maximumf %45, %46 : vector<8x768xf32>
    %c0_38 = arith.constant 0 : index
    %c0_39 = arith.constant 0 : index
    %48 = vector.load %arg4[%c0_38, %c0_39] : memref<4x8xf32, #tpu.memory_space<vmem>>, vector<4x8xf32>
    %cst_40 = arith.constant dense<0.000000e+00> : vector<4x768xf32>
    %49 = tpu.matmul %48, %47, %cst_40 {dimension_numbers = #tpu.dot_dimension_numbers<[1], [0], [0], [1], [0, 0, 1, 1], [], []>} : vector<4x8xf32>, vector<8x768xf32>, vector<4x768xf32> -> vector<4x768xf32>
    %c0_41 = arith.constant 0 : index
    %c0_42 = arith.constant 0 : index
    %50 = vector.load %arg5[%c0_41, %c0_42] : memref<4x1xf32, #tpu.memory_space<vmem>>, vector<4x1xf32>
    %51 = vector.broadcast %50 : vector<4x1xf32> to vector<4x768xf32>
    %52 = arith.addf %49, %51 : vector<4x768xf32>
    %53 = vector.extract_strided_slice %52 {offsets = [0, 0], sizes = [4, 384], strides = [1, 1]} : vector<4x768xf32> to vector<4x384xf32>
    %c0_43 = arith.constant 0 : index
    %c0_44 = arith.constant 0 : index
    %c0_45 = arith.constant 0 : index
    %54 = vector.load %arg6[%c0_43, %c0_44, %c0_45] : memref<2x4x384xf32, #tpu.memory_space<vmem>>, vector<1x4x384xf32>
    %55 = vector.shape_cast %54 : vector<1x4x384xf32> to vector<4x384xf32>
    %56 = vector.shape_cast %53 : vector<4x384xf32> to vector<1x4x384xf32>
    tpu.vector_store %arg6[%c0_43, %c0_44, %c0_45], %56 {strides = array<i32>} : memref<2x4x384xf32, #tpu.memory_space<vmem>>, vector<1x4x384xf32>,
    %57 = vector.extract_strided_slice %52 {offsets = [0, 384], sizes = [4, 384], strides = [1, 1]} : vector<4x768xf32> to vector<4x384xf32>
    %c1_46 = arith.constant 1 : index
    %c0_47 = arith.constant 0 : index
    %c0_48 = arith.constant 0 : index
    %58 = vector.load %arg6[%c1_46, %c0_47, %c0_48] : memref<2x4x384xf32, #tpu.memory_space<vmem>>, vector<1x4x384xf32>
    %59 = vector.shape_cast %58 : vector<1x4x384xf32> to vector<4x384xf32>
    %60 = vector.shape_cast %57 : vector<4x384xf32> to vector<1x4x384xf32>
    tpu.vector_store %arg6[%c1_46, %c0_47, %c0_48], %60 {strides = array<i32>} : memref<2x4x384xf32, #tpu.memory_space<vmem>>, vector<1x4x384xf32>,
    return
  }
  func.func @transform_0(%arg0: i32) -> (i32, i32, i32) {
    %c0_i32 = arith.constant 0 : i32
    %c0_i32_0 = arith.constant 0 : i32
    %c0_i32_1 = arith.constant 0 : i32
    %c0_i32_2 = arith.constant 0 : i32
    return %c0_i32, %c0_i32_0, %c0_i32_1 : i32, i32, i32
  }
  func.func @transform_1(%arg0: i32) -> (i32, i32) {
    %c0_i32 = arith.constant 0 : i32
    %c0_i32_0 = arith.constant 0 : i32
    %c0_i32_1 = arith.constant 0 : i32
    return %c0_i32, %c0_i32_0 : i32, i32
  }
  func.func @transform_2(%arg0: i32) -> (i32, i32) {
    %c0_i32 = arith.constant 0 : i32
    %c0_i32_0 = arith.constant 0 : i32
    %c0_i32_1 = arith.constant 0 : i32
    return %c0_i32, %c0_i32_0 : i32, i32
  }
  func.func @transform_3(%arg0: i32) -> (i32, i32) {
    %c0_i32 = arith.constant 0 : i32
    %c0_i32_0 = arith.constant 0 : i32
    %c0_i32_1 = arith.constant 0 : i32
    return %c0_i32, %c0_i32_0 : i32, i32
  }
  func.func @transform_4(%arg0: i32) -> (i32, i32) {
    %c0_i32 = arith.constant 0 : i32
    %c0_i32_0 = arith.constant 0 : i32
    %c0_i32_1 = arith.constant 0 : i32
    return %c0_i32, %c0_i32_0 : i32, i32
  }
  func.func @transform_5(%arg0: i32) -> (i32, i32, i32) {
    %c0_i32 = arith.constant 0 : i32
    %c0_i32_0 = arith.constant 0 : i32
    %c0_i32_1 = arith.constant 0 : i32
    %c0_i32_2 = arith.constant 0 : i32
    return %c0_i32, %c0_i32_0, %c0_i32_1 : i32, i32, i32
  }
}

</mosaic_0001>

<llo_original>
// kernel: segmentor_pallas.1
$region0: #{segmentor_pallas.1}
  #allocation0 [shape = 'u32[]', space=smem, size = 0x4, offset = 0x4, fixed_abs, tag = 'smem constant byte address 0x4 - core index']
  #allocation1 [shape = 'u32[144,128]{1,0:T(1,128)}', space=vmem, size = 0x12000, scoped, tag = 'internal scratch']
  #allocation2 [shape = 'f32[36,768]{1,0:T(8,128)}', space=vmem, size = 0x1e000, scoped, tag = 'scratch operand']
  %s0 = inlined_call_operand.vmem [shape: f32[2,4,512], index: 0, kind: input, shape index: {}]
  %s1 = inlined_call_operand.vmem [shape: f32[8,36], index: 1, kind: input, shape index: {}]
  %s2 = inlined_call_operand.vmem [shape: f32[8,1], index: 2, kind: input, shape index: {}]
  %s3 = inlined_call_operand.vmem [shape: f32[4,8], index: 3, kind: input, shape index: {}]
  %s4 = inlined_call_operand.vmem [shape: f32[4,1], index: 4, kind: input, shape index: {}]
  %s5 = inlined_call_operand.vmem [shape: f32[2,4,384], index: 5, kind: output, shape index: {}]
  %s6 = sld [smem:[#allocation0]]
  $region30: #{segmentor_pallas.1} parent=0
    _
  %s8 = ssub.s32 1, %s6
  %s9 = scalar_select 0, %s8, %s6
  // Predicated region
  $region2: #{segmentor_pallas.1} parent=0 // pred_check
    _
  $region3: #{segmentor_pallas.1} parent=0 // pred_check_branch
    %11 = sbr.rel (0) target = $region5
  $region4: #{segmentor_pallas.1} parent=0 // pred_region
    _
  $region5: #{segmentor_pallas.1} parent=0 // pred_fallthru
    _
  // Predicated region
  $region6: #{segmentor_pallas.1} parent=0 // pred_check
    _
  $region7: #{segmentor_pallas.1} parent=0 // pred_check_branch
    %13 = sbr.rel (0) target = $region9
  $region8: #{segmentor_pallas.1} parent=0 // pred_region
    _
  $region9: #{segmentor_pallas.1} parent=0 // pred_fallthru
    _
  // Predicated region
  $region10: #{segmentor_pallas.1} parent=0 // pred_check
    _
  $region11: #{segmentor_pallas.1} parent=0 // pred_check_branch
    %15 = sbr.rel (0) target = $region13
  $region12: #{segmentor_pallas.1} parent=0 // pred_region
    _
  $region13: #{segmentor_pallas.1} parent=0 // pred_fallthru
    _
  // Predicated region
  $region14: #{segmentor_pallas.1} parent=0 // pred_check
    _
  $region15: #{segmentor_pallas.1} parent=0 // pred_check_branch
    %17 = sbr.rel (0) target = $region17
  $region16: #{segmentor_pallas.1} parent=0 // pred_region
    _
  $region17: #{segmentor_pallas.1} parent=0 // pred_fallthru
    _
  // Predicated region
  $region18: #{segmentor_pallas.1} parent=0 // pred_check
    _
  $region19: #{segmentor_pallas.1} parent=0 // pred_check_branch
    %19 = sbr.rel (0) target = $region21
  $region20: #{segmentor_pallas.1} parent=0 // pred_region
    _
  $region21: #{segmentor_pallas.1} parent=0 // pred_fallthru
    _
  %v20 = vld [vmem:[%s0] sm:$0xff]
  %v21 = vld [vmem:[%s0 + $0x8] sm:$0xff]
  %v24 = vcombine.high %v20, %v20
  %26 = vst [vmem:[#allocation2] sm:$0xf] %v20
  %27 = vst [vmem:[#allocation2 + $0x8] sm:$0xf] %v24
  %28 = vst [vmem:[#allocation2 + $0x10] sm:$0xf] %v21
  %v29 = vcombine.low %v20, %v20
  %v30 = vcombine.low %v21, %v21
  %31 = vrot.lane.b32.xlu0 %v29, 127
  %v32 = vpop.permute.xlu0 %31
  %33 = vrot.lane.b32.xlu0 %v20, 127
  %v34 = vpop.permute.xlu0 %33
  %35 = vrot.lane.b32.xlu0 %v30, 127
  %v36 = vpop.permute.xlu0 %35
  %37 = vrot.lane.b32.xlu0 %v21, 127
  %v38 = vpop.permute.xlu0 %37
  %vm39 = vcmask 1039360
  %v40 = vsel %vm39, %v32, %v34
  %v41 = vsel %vm39, %v34, %v36
  %v42 = vsel %vm39, %v36, %v38
  %46 = vst [vmem:[#allocation2] sm:$0xf0] %v40
  %47 = vst [vmem:[#allocation2 + $0x8] sm:$0xf0] %v41
  %48 = vst [vmem:[#allocation2 + $0x10] sm:$0xf0] %v42
  %v49 = vcombine.high %v21, %v21
  %50 = vrot.lane.b32.xlu0 %v20, 126
  %v51 = vpop.permute.xlu0 %50
  %52 = vrot.lane.b32.xlu0 %v24, 126
  %v53 = vpop.permute.xlu0 %52
  %54 = vrot.lane.b32.xlu0 %v21, 126
  %v55 = vpop.permute.xlu0 %54
  %56 = vrot.lane.b32.xlu0 %v49, 126
  %v57 = vpop.permute.xlu0 %56
  %vm58 = vcmask 1031168
  %v59 = vsel %vm58, %v51, %v53
  %v60 = vsel %vm58, %v53, %v55
  %v61 = vsel %vm58, %v55, %v57
  %65 = vst [vmem:[#allocation2 + $0x30] sm:$0xf] %v59
  %66 = vst [vmem:[#allocation2 + $0x38] sm:$0xf] %v60
  %67 = vst [vmem:[#allocation2 + $0x40] sm:$0xf] %v61
  %68 = vrot.lane.b32.xlu0 %v29, 110
  %v69 = vpop.permute.xlu0 %68
  %70 = vrot.lane.b32.xlu0 %v20, 110
  %v71 = vpop.permute.xlu0 %70
  %72 = vrot.lane.b32.xlu0 %v30, 110
  %v73 = vpop.permute.xlu0 %72
  %74 = vrot.lane.b32.xlu0 %v21, 110
  %v75 = vpop.permute.xlu0 %74
  %vm76 = vcmask 900096
  %v77 = vsel %vm76, %v69, %v71
  %v78 = vsel %vm76, %v71, %v73
  %v79 = vsel %vm76, %v73, %v75
  %83 = vst [vmem:[#allocation2 + $0x30] sm:$0xf0] %v77
  %84 = vst [vmem:[#allocation2 + $0x38] sm:$0xf0] %v78
  %85 = vst [vmem:[#allocation2 + $0x40] sm:$0xf0] %v79
  %86 = vrot.lane.b32.xlu0 %v20, 109
  %v87 = vpop.permute.xlu0 %86
  %88 = vrot.lane.b32.xlu0 %v24, 109
  %v89 = vpop.permute.xlu0 %88
  %90 = vrot.lane.b32.xlu0 %v21, 109
  %v91 = vpop.permute.xlu0 %90
  %92 = vrot.lane.b32.xlu0 %v49, 109
  %v93 = vpop.permute.xlu0 %92
  %vm94 = vcmask 891904
  %v95 = vsel %vm94, %v87, %v89
  %v96 = vsel %vm94, %v89, %v91
  %v97 = vsel %vm94, %v91, %v93
  %101 = vst [vmem:[#allocation2 + $0x60] sm:$0xf] %v95
  %102 = vst [vmem:[#allocation2 + $0x68] sm:$0xf] %v96
  %103 = vst [vmem:[#allocation2 + $0x70] sm:$0xf] %v97
  %104 = vrot.lane.b32.xlu0 %v29, 108
  %v105 = vpop.permute.xlu0 %104
  %106 = vrot.lane.b32.xlu0 %v20, 108
  %v107 = vpop.permute.xlu0 %106
  %108 = vrot.lane.b32.xlu0 %v30, 108
  %v109 = vpop.permute.xlu0 %108
  %110 = vrot.lane.b32.xlu0 %v21, 108
  %v111 = vpop.permute.xlu0 %110
  %vm112 = vcmask 883712
  %v113 = vsel %vm112, %v105, %v107
  %v114 = vsel %vm112, %v107, %v109
  %v115 = vsel %vm112, %v109, %v111
  %119 = vst [vmem:[#allocation2 + $0x60] sm:$0xf0] %v113
  %120 = vst [vmem:[#allocation2 + $0x68] sm:$0xf0] %v114
  %121 = vst [vmem:[#allocation2 + $0x70] sm:$0xf0] %v115
  %122 = vrot.lane.b32.xlu0 %v20, 92
  %v123 = vpop.permute.xlu0 %122
  %124 = vrot.lane.b32.xlu0 %v24, 92
  %v125 = vpop.permute.xlu0 %124
  %126 = vrot.lane.b32.xlu0 %v21, 92
  %v127 = vpop.permute.xlu0 %126
  %128 = vrot.lane.b32.xlu0 %v49, 92
  %v129 = vpop.permute.xlu0 %128
  %vm130 = vcmask 752640
  %v131 = vsel %vm130, %v123, %v125
  %v132 = vsel %vm130, %v125, %v127
  %v133 = vsel %vm130, %v127, %v129
  %137 = vst [vmem:[#allocation2 + $0x90] sm:$0xf] %v131
  %138 = vst [vmem:[#allocation2 + $0x98] sm:$0xf] %v132
  %139 = vst [vmem:[#allocation2 + $0xa0] sm:$0xf] %v133
  %140 = vrot.lane.b32.xlu0 %v29, 91
  %v141 = vpop.permute.xlu0 %140
  %142 = vrot.lane.b32.xlu0 %v20, 91
  %v143 = vpop.permute.xlu0 %142
  %144 = vrot.lane.b32.xlu0 %v30, 91
  %v145 = vpop.permute.xlu0 %144
  %146 = vrot.lane.b32.xlu0 %v21, 91
  %v147 = vpop.permute.xlu0 %146
  %vm148 = vcmask 744448
  %v149 = vsel %vm148, %v141, %v143
  %v150 = vsel %vm148, %v143, %v145
  %v151 = vsel %vm148, %v145, %v147
  %155 = vst [vmem:[#allocation2 + $0x90] sm:$0xf0] %v149
  %156 = vst [vmem:[#allocation2 + $0x98] sm:$0xf0] %v150
  %157 = vst [vmem:[#allocation2 + $0xa0] sm:$0xf0] %v151
  %158 = vrot.lane.b32.xlu0 %v20, 90
  %v159 = vpop.permute.xlu0 %158
  %160 = vrot.lane.b32.xlu0 %v24, 90
  %v161 = vpop.permute.xlu0 %160
  %162 = vrot.lane.b32.xlu0 %v21, 90
  %v163 = vpop.permute.xlu0 %162
  %164 = vrot.lane.b32.xlu0 %v49, 90
  %v165 = vpop.permute.xlu0 %164
  %vm166 = vcmask 736256
  %v167 = vsel %vm166, %v159, %v161
  %v168 = vsel %vm166, %v161, %v163
  %v169 = vsel %vm166, %v163, %v165
  %173 = vst [vmem:[#allocation2 + $0xc0] sm:$0xf] %v167
  %174 = vst [vmem:[#allocation2 + $0xc8] sm:$0xf] %v168
  %175 = vst [vmem:[#allocation2 + $0xd0] sm:$0xf] %v169
  %s176 = scalar_lea.vmem %s0, 16
  %v177 = vld [vmem:[%s176] sm:$0xff]
  %v178 = vld [vmem:[%s176 + $0x8] sm:$0xff]
  %v181 = vcombine.high %v177, %v177
  %183 = vst [vmem:[#allocation2 + $0x18] sm:$0xf] %v177
  %184 = vst [vmem:[#allocation2 + $0x20] sm:$0xf] %v181
  %185 = vst [vmem:[#allocation2 + $0x28] sm:$0xf] %v178
  %v186 = vcombine.low %v177, %v177
  %v187 = vcombine.low %v178, %v178
  %188 = vrot.lane.b32.xlu0 %v186, 127
  %v189 = vpop.permute.xlu0 %188
  %190 = vrot.lane.b32.xlu0 %v177, 127
  %v191 = vpop.permute.xlu0 %190
  %192 = vrot.lane.b32.xlu0 %v187, 127
  %v193 = vpop.permute.xlu0 %192
  %194 = vrot.lane.b32.xlu0 %v178, 127
  %v195 = vpop.permute.xlu0 %194
  %v196 = vsel %vm39, %v189, %v191
  %v197 = vsel %vm39, %v191, %v193
  %v198 = vsel %vm39, %v193, %v195
  %202 = vst [vmem:[#allocation2 + $0x18] sm:$0xf0] %v196
  %203 = vst [vmem:[#allocation2 + $0x20] sm:$0xf0] %v197
  %204 = vst [vmem:[#allocation2 + $0x28] sm:$0xf0] %v198
  %v205 = vcombine.high %v178, %v178
  %206 = vrot.lane.b32.xlu0 %v177, 126
  %v207 = vpop.permute.xlu0 %206
  %208 = vrot.lane.b32.xlu0 %v181, 126
  %v209 = vpop.permute.xlu0 %208
  %210 = vrot.lane.b32.xlu0 %v178, 126
  %v211 = vpop.permute.xlu0 %210
  %212 = vrot.lane.b32.xlu0 %v205, 126
  %v213 = vpop.permute.xlu0 %212
  %v214 = vsel %vm58, %v207, %v209
  %v215 = vsel %vm58, %v209, %v211
  %v216 = vsel %vm58, %v211, %v213
  %220 = vst [vmem:[#allocation2 + $0x48] sm:$0xf] %v214
  %221 = vst [vmem:[#allocation2 + $0x50] sm:$0xf] %v215
  %222 = vst [vmem:[#allocation2 + $0x58] sm:$0xf] %v216
  %223 = vrot.lane.b32.xlu0 %v186, 110
  %v224 = vpop.permute.xlu0 %223
  %225 = vrot.lane.b32.xlu0 %v177, 110
  %v226 = vpop.permute.xlu0 %225
  %227 = vrot.lane.b32.xlu0 %v187, 110
  %v228 = vpop.permute.xlu0 %227
  %229 = vrot.lane.b32.xlu0 %v178, 110
  %v230 = vpop.permute.xlu0 %229
  %v231 = vsel %vm76, %v224, %v226
  %v232 = vsel %vm76, %v226, %v228
  %v233 = vsel %vm76, %v228, %v230
  %237 = vst [vmem:[#allocation2 + $0x48] sm:$0xf0] %v231
  %238 = vst [vmem:[#allocation2 + $0x50] sm:$0xf0] %v232
  %239 = vst [vmem:[#allocation2 + $0x58] sm:$0xf0] %v233
  %240 = vrot.lane.b32.xlu0 %v177, 109
  %v241 = vpop.permute.xlu0 %240
  %242 = vrot.lane.b32.xlu0 %v181, 109
  %v243 = vpop.permute.xlu0 %242
  %244 = vrot.lane.b32.xlu0 %v178, 109
  %v245 = vpop.permute.xlu0 %244
  %246 = vrot.lane.b32.xlu0 %v205, 109
  %v247 = vpop.permute.xlu0 %246
  %v248 = vsel %vm94, %v241, %v243
  %v249 = vsel %vm94, %v243, %v245
  %v250 = vsel %vm94, %v245, %v247
  %254 = vst [vmem:[#allocation2 + $0x78] sm:$0xf] %v248
  %255 = vst [vmem:[#allocation2 + $0x80] sm:$0xf] %v249
  %256 = vst [vmem:[#allocation2 + $0x88] sm:$0xf] %v250
  %257 = vrot.lane.b32.xlu0 %v186, 108
  %v258 = vpop.permute.xlu0 %257
  %259 = vrot.lane.b32.xlu0 %v177, 108
  %v260 = vpop.permute.xlu0 %259
  %261 = vrot.lane.b32.xlu0 %v187, 108
  %v262 = vpop.permute.xlu0 %261
  %263 = vrot.lane.b32.xlu0 %v178, 108
  %v264 = vpop.permute.xlu0 %263
  %v265 = vsel %vm112, %v258, %v260
  %v266 = vsel %vm112, %v260, %v262
  %v267 = vsel %vm112, %v262, %v264
  %271 = vst [vmem:[#allocation2 + $0x78] sm:$0xf0] %v265
  %272 = vst [vmem:[#allocation2 + $0x80] sm:$0xf0] %v266
  %273 = vst [vmem:[#allocation2 + $0x88] sm:$0xf0] %v267
  %274 = vrot.lane.b32.xlu0 %v177, 92
  %v275 = vpop.permute.xlu0 %274
  %276 = vrot.lane.b32.xlu0 %v181, 92
  %v277 = vpop.permute.xlu0 %276
  %278 = vrot.lane.b32.xlu0 %v178, 92
  %v279 = vpop.permute.xlu0 %278
  %280 = vrot.lane.b32.xlu0 %v205, 92
  %v281 = vpop.permute.xlu0 %280
  %v282 = vsel %vm130, %v275, %v277
  %v283 = vsel %vm130, %v277, %v279
  %v284 = vsel %vm130, %v279, %v281
  %288 = vst [vmem:[#allocation2 + $0xa8] sm:$0xf] %v282
  %289 = vst [vmem:[#allocation2 + $0xb0] sm:$0xf] %v283
  %290 = vst [vmem:[#allocation2 + $0xb8] sm:$0xf] %v284
  %291 = vrot.lane.b32.xlu0 %v186, 91
  %v292 = vpop.permute.xlu0 %291
  %293 = vrot.lane.b32.xlu0 %v177, 91
  %v294 = vpop.permute.xlu0 %293
  %295 = vrot.lane.b32.xlu0 %v187, 91
  %v296 = vpop.permute.xlu0 %295
  %297 = vrot.lane.b32.xlu0 %v178, 91
  %v298 = vpop.permute.xlu0 %297
  %v299 = vsel %vm148, %v292, %v294
  %v300 = vsel %vm148, %v294, %v296
  %v301 = vsel %vm148, %v296, %v298
  %305 = vst [vmem:[#allocation2 + $0xa8] sm:$0xf0] %v299
  %306 = vst [vmem:[#allocation2 + $0xb0] sm:$0xf0] %v300
  %307 = vst [vmem:[#allocation2 + $0xb8] sm:$0xf0] %v301
  %308 = vrot.lane.b32.xlu0 %v177, 90
  %v309 = vpop.permute.xlu0 %308
  %310 = vrot.lane.b32.xlu0 %v181, 90
  %v311 = vpop.permute.xlu0 %310
  %312 = vrot.lane.b32.xlu0 %v178, 90
  %v313 = vpop.permute.xlu0 %312
  %314 = vrot.lane.b32.xlu0 %v205, 90
  %v315 = vpop.permute.xlu0 %314
  %v316 = vsel %vm166, %v309, %v311
  %v317 = vsel %vm166, %v311, %v313
  %v318 = vsel %vm166, %v313, %v315
  %322 = vst [vmem:[#allocation2 + $0xd8] sm:$0xf] %v316
  %323 = vst [vmem:[#allocation2 + $0xe0] sm:$0xf] %v317
  %324 = vst [vmem:[#allocation2 + $0xe8] sm:$0xf] %v318
  %v325 = vld [vmem:[%s1] sm:$0xff]
  %v326 = vld [vmem:[#allocation2] sm:$0xff]
  %v327 = vld [vmem:[#allocation2 + $0x8] sm:$0xff]
  %v328 = vld [vmem:[#allocation2 + $0x10] sm:$0xff]
  %v329 = vld [vmem:[#allocation2 + $0x18] sm:$0xff]
  %v330 = vld [vmem:[#allocation2 + $0x20] sm:$0xff]
  %v331 = vld [vmem:[#allocation2 + $0x28] sm:$0xff]
  %v332 = vld [vmem:[#allocation2 + $0x30] sm:$0xff]
  %v333 = vld [vmem:[#allocation2 + $0x38] sm:$0xff]
  %v334 = vld [vmem:[#allocation2 + $0x40] sm:$0xff]
  %v335 = vld [vmem:[#allocation2 + $0x48] sm:$0xff]
  %v336 = vld [vmem:[#allocation2 + $0x50] sm:$0xff]
  %v337 = vld [vmem:[#allocation2 + $0x58] sm:$0xff]
  %v338 = vld [vmem:[#allocation2 + $0x60] sm:$0xff]
  %v339 = vld [vmem:[#allocation2 + $0x68] sm:$0xff]
  %v340 = vld [vmem:[#allocation2 + $0x70] sm:$0xff]
  %v341 = vld [vmem:[#allocation2 + $0x78] sm:$0xff]
  %v342 = vld [vmem:[#allocation2 + $0x80] sm:$0xff]
  %v343 = vld [vmem:[#allocation2 + $0x88] sm:$0xff]
  %v344 = vld [vmem:[#allocation2 + $0x90] sm:$0xff]
  %v345 = vld [vmem:[#allocation2 + $0x98] sm:$0xff]
  %v346 = vld [vmem:[#allocation2 + $0xa0] sm:$0xff]
  %v347 = vld [vmem:[#allocation2 + $0xa8] sm:$0xff]
  %v348 = vld [vmem:[#allocation2 + $0xb0] sm:$0xff]
  %v349 = vld [vmem:[#allocation2 + $0xb8] sm:$0xff]
  %v350 = vld [vmem:[#allocation2 + $0xc0] sm:$0xf]
  %v351 = vld [vmem:[#allocation2 + $0xc8] sm:$0xf]
  %v352 = vld [vmem:[#allocation2 + $0xd0] sm:$0xf]
  %v353 = vld [vmem:[#allocation2 + $0xd8] sm:$0xf]
  %v354 = vld [vmem:[#allocation2 + $0xe0] sm:$0xf]
  %v355 = vld [vmem:[#allocation2 + $0xe8] sm:$0xf]
  %v356 = vld [vmem:[%s2] sm:$0xff]
  %358 = vset.pattern.permute.xlu0 0
  %359 = vperm.xlu0 %358, %v356
  %v360 = vpop.permute.xlu0 %359
  %vm362 = vcmask 293888
  %v364 = vsel %vm362, %v325, 0
  %vm366 = vcmask 1043456
  %v368 = vsel %vm366, %v350, 0
  %v371 = vsel %vm366, %v351, 0
  %v374 = vsel %vm366, %v352, 0
  %v377 = vsel %vm366, %v353, 0
  %v380 = vsel %vm366, %v354, 0
  %v383 = vsel %vm366, %v355, 0
  %385 = vmatprep.subr.mxu0 0.0
  %386 = vmatpush1.msra.mxu0 0.0
  %387 = vmatprep.subr.mxu0 0.0
  %388 = vmatpush1.msra.mxu0 0.0
  %389 = vmatprep.subr.mxu0 0.0
  %390 = vmatpush1.msra.mxu0 0.0
  %391 = vmatprep.subr.mxu0 0.0
  %392 = vmatpush1.msra.mxu0 0.0
  %393 = vmatprep.subr.mxu0 0.0
  %394 = vmatpush1.msra.mxu0 0.0
  %395 = vmatprep.subr.mxu0 0.0
  %396 = vmatpush1.msra.mxu0 0.0
  %397 = vmatprep.subr.mxu0 0.0
  %398 = vmatpush1.msra.mxu0 0.0
  %399 = vmatprep.subr.mxu0 0.0
  %400 = vmatpush1.msra.mxu0 0.0
  %401 = vmatprep.subr.mxu0 0.0
  %402 = vmatpush1.msra.mxu0 0.0
  %403 = vmatprep.subr.mxu0 0.0
  %404 = vmatpush1.msra.mxu0 0.0
  %405 = vmatprep.subr.mxu0 0.0
  %406 = vmatpush1.msra.mxu0 0.0
  %407 = vmatprep.subr.mxu0 %v371
  %408 = vmatpush1.msra.mxu0 %v368
  %409 = vmatprep.subr.mxu0 %v345
  %410 = vmatpush1.msra.mxu0 %v344
  %411 = vmatprep.subr.mxu0 %v339
  %412 = vmatpush1.msra.mxu0 %v338
  %413 = vmatprep.subr.mxu0 %v333
  %414 = vmatpush1.msra.mxu0 %v332
  %415 = vmatprep.subr.mxu0 %v327
  %416 = vmatpush1.msra.mxu0 %v326
  %417 = vmatprep.subr.mxu0 0.0
  %418 = vmatpush2.msra.mxu0 0.0
  %419 = vmatprep.subr.mxu0 0.0
  %420 = vmatpush2.msra.mxu0 0.0
  %421 = vmatprep.subr.mxu0 0.0
  %422 = vmatpush2.msra.mxu0 0.0
  %423 = vmatprep.subr.mxu0 0.0
  %424 = vmatpush2.msra.mxu0 0.0
  %425 = vmatprep.subr.mxu0 0.0
  %426 = vmatpush2.msra.mxu0 0.0
  %427 = vmatprep.subr.mxu0 0.0
  %428 = vmatpush2.msra.mxu0 0.0
  %429 = vmatprep.subr.mxu0 0.0
  %430 = vmatpush2.msra.mxu0 0.0
  %431 = vmatprep.subr.mxu0 0.0
  %432 = vmatpush2.msra.mxu0 0.0
  %433 = vmatprep.subr.mxu0 0.0
  %434 = vmatpush2.msra.mxu0 0.0
  %435 = vmatprep.subr.mxu0 0.0
  %436 = vmatpush2.msra.mxu0 0.0
  %437 = vmatprep.subr.mxu0 0.0
  %438 = vmatpush2.msra.mxu0 0.0
  %439 = vmatprep.subr.mxu0 0.0
  %440 = vmatpush2.msra.mxu0 0.0
  %441 = vmatprep.subr.mxu0 0.0
  %442 = vmatpush2.msra.mxu0 0.0
  %443 = vmatprep.subr.mxu0 0.0
  %444 = vmatpush2.msra.mxu0 0.0
  %445 = vmatprep.subr.mxu0 0.0
  %446 = vmatpush2.msra.mxu0 0.0
  %447 = vmatprep.subr.mxu0 0.0
  %448 = vmatpush2.msra.mxu0 0.0
  %449 = vmatprep.mubr.f32.mxu0 0.0
  %450 = vmatmul.mubr.f32.gmra.mxu0 %v364
  %v451 = vpop.f32.mrf.mxu0
  %v452 = vadd.f32 %v360, %v451
  %v453 = vpop.f32.mrf.mxu0
  %v454 = vadd.f32 %v360, %v453
  %455 = vdwg.mxu0
  %456 = vmatprep.subr.mxu0 0.0
  %457 = vmatpush1.msra.mxu0 0.0
  %458 = vmatprep.subr.mxu0 0.0
  %459 = vmatpush1.msra.mxu0 0.0
  %460 = vmatprep.subr.mxu0 0.0
  %461 = vmatpush1.msra.mxu0 0.0
  %462 = vmatprep.subr.mxu0 0.0
  %463 = vmatpush1.msra.mxu0 0.0
  %464 = vmatprep.subr.mxu0 0.0
  %465 = vmatpush1.msra.mxu0 0.0
  %466 = vmatprep.subr.mxu0 0.0
  %467 = vmatpush1.msra.mxu0 0.0
  %468 = vmatprep.subr.mxu0 0.0
  %469 = vmatpush1.msra.mxu0 0.0
  %470 = vmatprep.subr.mxu0 0.0
  %471 = vmatpush1.msra.mxu0 0.0
  %472 = vmatprep.subr.mxu0 0.0
  %473 = vmatpush1.msra.mxu0 0.0
  %474 = vmatprep.subr.mxu0 0.0
  %475 = vmatpush1.msra.mxu0 0.0
  %476 = vmatprep.subr.mxu0 0.0
  %477 = vmatpush1.msra.mxu0 0.0
  %478 = vmatprep.subr.mxu0 %v377
  %479 = vmatpush1.msra.mxu0 %v374
  %480 = vmatprep.subr.mxu0 %v347
  %481 = vmatpush1.msra.mxu0 %v346
  %482 = vmatprep.subr.mxu0 %v341
  %483 = vmatpush1.msra.mxu0 %v340
  %484 = vmatprep.subr.mxu0 %v335
  %485 = vmatpush1.msra.mxu0 %v334
  %486 = vmatprep.subr.mxu0 %v329
  %487 = vmatpush1.msra.mxu0 %v328
  %488 = vmatprep.subr.mxu0 0.0
  %489 = vmatpush2.msra.mxu0 0.0
  %490 = vmatprep.subr.mxu0 0.0
  %491 = vmatpush2.msra.mxu0 0.0
  %492 = vmatprep.subr.mxu0 0.0
  %493 = vmatpush2.msra.mxu0 0.0
  %494 = vmatprep.subr.mxu0 0.0
  %495 = vmatpush2.msra.mxu0 0.0
  %496 = vmatprep.subr.mxu0 0.0
  %497 = vmatpush2.msra.mxu0 0.0
  %498 = vmatprep.subr.mxu0 0.0
  %499 = vmatpush2.msra.mxu0 0.0
  %500 = vmatprep.subr.mxu0 0.0
  %501 = vmatpush2.msra.mxu0 0.0
  %502 = vmatprep.subr.mxu0 0.0
  %503 = vmatpush2.msra.mxu0 0.0
  %504 = vmatprep.subr.mxu0 0.0
  %505 = vmatpush2.msra.mxu0 0.0
  %506 = vmatprep.subr.mxu0 0.0
  %507 = vmatpush2.msra.mxu0 0.0
  %508 = vmatprep.subr.mxu0 0.0
  %509 = vmatpush2.msra.mxu0 0.0
  %510 = vmatprep.subr.mxu0 0.0
  %511 = vmatpush2.msra.mxu0 0.0
  %512 = vmatprep.subr.mxu0 0.0
  %513 = vmatpush2.msra.mxu0 0.0
  %514 = vmatprep.subr.mxu0 0.0
  %515 = vmatpush2.msra.mxu0 0.0
  %516 = vmatprep.subr.mxu0 0.0
  %517 = vmatpush2.msra.mxu0 0.0
  %518 = vmatprep.subr.mxu0 0.0
  %519 = vmatpush2.msra.mxu0 0.0
  %520 = vmatprep.mubr.f32.mxu0 0.0
  %521 = vmatmul.mubr.f32.gmra.mxu0 %v364
  %v522 = vpop.f32.mrf.mxu0
  %v523 = vadd.f32 %v360, %v522
  %v524 = vpop.f32.mrf.mxu0
  %v525 = vadd.f32 %v360, %v524
  %526 = vdwg.mxu0
  %527 = vmatprep.subr.mxu0 0.0
  %528 = vmatpush1.msra.mxu0 0.0
  %529 = vmatprep.subr.mxu0 0.0
  %530 = vmatpush1.msra.mxu0 0.0
  %531 = vmatprep.subr.mxu0 0.0
  %532 = vmatpush1.msra.mxu0 0.0
  %533 = vmatprep.subr.mxu0 0.0
  %534 = vmatpush1.msra.mxu0 0.0
  %535 = vmatprep.subr.mxu0 0.0
  %536 = vmatpush1.msra.mxu0 0.0
  %537 = vmatprep.subr.mxu0 0.0
  %538 = vmatpush1.msra.mxu0 0.0
  %539 = vmatprep.subr.mxu0 0.0
  %540 = vmatpush1.msra.mxu0 0.0
  %541 = vmatprep.subr.mxu0 0.0
  %542 = vmatpush1.msra.mxu0 0.0
  %543 = vmatprep.subr.mxu0 0.0
  %544 = vmatpush1.msra.mxu0 0.0
  %545 = vmatprep.subr.mxu0 0.0
  %546 = vmatpush1.msra.mxu0 0.0
  %547 = vmatprep.subr.mxu0 0.0
  %548 = vmatpush1.msra.mxu0 0.0
  %549 = vmatprep.subr.mxu0 %v383
  %550 = vmatpush1.msra.mxu0 %v380
  %551 = vmatprep.subr.mxu0 %v349
  %552 = vmatpush1.msra.mxu0 %v348
  %553 = vmatprep.subr.mxu0 %v343
  %554 = vmatpush1.msra.mxu0 %v342
  %555 = vmatprep.subr.mxu0 %v337
  %556 = vmatpush1.msra.mxu0 %v336
  %557 = vmatprep.subr.mxu0 %v331
  %558 = vmatpush1.msra.mxu0 %v330
  %559 = vmatprep.subr.mxu0 0.0
  %560 = vmatpush2.msra.mxu0 0.0
  %561 = vmatprep.subr.mxu0 0.0
  %562 = vmatpush2.msra.mxu0 0.0
  %563 = vmatprep.subr.mxu0 0.0
  %564 = vmatpush2.msra.mxu0 0.0
  %565 = vmatprep.subr.mxu0 0.0
  %566 = vmatpush2.msra.mxu0 0.0
  %567 = vmatprep.subr.mxu0 0.0
  %568 = vmatpush2.msra.mxu0 0.0
  %569 = vmatprep.subr.mxu0 0.0
  %570 = vmatpush2.msra.mxu0 0.0
  %571 = vmatprep.subr.mxu0 0.0
  %572 = vmatpush2.msra.mxu0 0.0
  %573 = vmatprep.subr.mxu0 0.0
  %574 = vmatpush2.msra.mxu0 0.0
  %575 = vmatprep.subr.mxu0 0.0
  %576 = vmatpush2.msra.mxu0 0.0
  %577 = vmatprep.subr.mxu0 0.0
  %578 = vmatpush2.msra.mxu0 0.0
  %579 = vmatprep.subr.mxu0 0.0
  %580 = vmatpush2.msra.mxu0 0.0
  %581 = vmatprep.subr.mxu0 0.0
  %582 = vmatpush2.msra.mxu0 0.0
  %583 = vmatprep.subr.mxu0 0.0
  %584 = vmatpush2.msra.mxu0 0.0
  %585 = vmatprep.subr.mxu0 0.0
  %586 = vmatpush2.msra.mxu0 0.0
  %587 = vmatprep.subr.mxu0 0.0
  %588 = vmatpush2.msra.mxu0 0.0
  %589 = vmatprep.subr.mxu0 0.0
  %590 = vmatpush2.msra.mxu0 0.0
  %591 = vmatprep.mubr.f32.mxu0 0.0
  %592 = vmatmul.mubr.f32.gmra.mxu0 %v364
  %v593 = vpop.f32.mrf.mxu0
  %v594 = vadd.f32 %v360, %v593
  %v595 = vpop.f32.mrf.mxu0
  %v596 = vadd.f32 %v360, %v595
  %597 = vdwg.mxu0
  %v598 = vmax.f32 %v452, 0.0
  %v599 = vmax.f32 %v454, 0.0
  %v600 = vmax.f32 %v523, 0.0
  %v601 = vmax.f32 %v525, 0.0
  %v602 = vmax.f32 %v594, 0.0
  %v603 = vmax.f32 %v596, 0.0
  %v604 = vld [vmem:[%s3] sm:$0xf]
  %v605 = vld [vmem:[%s4] sm:$0xf]
  %607 = vset.pattern.permute.xlu0 0
  %608 = vperm.xlu0 %607, %v605
  %v609 = vpop.permute.xlu0 %608
  %vm611 = vcmask 64512
  %v613 = vsel %vm611, %v604, 0
  %615 = vmatprep.subr.mxu0 0.0
  %616 = vmatpush1.msra.mxu0 0.0
  %617 = vmatprep.subr.mxu0 0.0
  %618 = vmatpush1.msra.mxu0 0.0
  %619 = vmatprep.subr.mxu0 0.0
  %620 = vmatpush1.msra.mxu0 0.0
  %621 = vmatprep.subr.mxu0 0.0
  %622 = vmatpush1.msra.mxu0 0.0
  %623 = vmatprep.subr.mxu0 0.0
  %624 = vmatpush1.msra.mxu0 0.0
  %625 = vmatprep.subr.mxu0 0.0
  %626 = vmatpush1.msra.mxu0 0.0
  %627 = vmatprep.subr.mxu0 0.0
  %628 = vmatpush1.msra.mxu0 0.0
  %629 = vmatprep.subr.mxu0 0.0
  %630 = vmatpush1.msra.mxu0 0.0
  %631 = vmatprep.subr.mxu0 0.0
  %632 = vmatpush1.msra.mxu0 0.0
  %633 = vmatprep.subr.mxu0 0.0
  %634 = vmatpush1.msra.mxu0 0.0
  %635 = vmatprep.subr.mxu0 0.0
  %636 = vmatpush1.msra.mxu0 0.0
  %637 = vmatprep.subr.mxu0 0.0
  %638 = vmatpush1.msra.mxu0 0.0
  %639 = vmatprep.subr.mxu0 0.0
  %640 = vmatpush1.msra.mxu0 0.0
  %641 = vmatprep.subr.mxu0 0.0
  %642 = vmatpush1.msra.mxu0 0.0
  %643 = vmatprep.subr.mxu0 0.0
  %644 = vmatpush1.msra.mxu0 0.0
  %645 = vmatprep.subr.mxu0 %v599
  %646 = vmatpush1.msra.mxu0 %v598
  %647 = vmatprep.subr.mxu0 0.0
  %648 = vmatpush2.msra.mxu0 0.0
  %649 = vmatprep.subr.mxu0 0.0
  %650 = vmatpush2.msra.mxu0 0.0
  %651 = vmatprep.subr.mxu0 0.0
  %652 = vmatpush2.msra.mxu0 0.0
  %653 = vmatprep.subr.mxu0 0.0
  %654 = vmatpush2.msra.mxu0 0.0
  %655 = vmatprep.subr.mxu0 0.0
  %656 = vmatpush2.msra.mxu0 0.0
  %657 = vmatprep.subr.mxu0 0.0
  %658 = vmatpush2.msra.mxu0 0.0
  %659 = vmatprep.subr.mxu0 0.0
  %660 = vmatpush2.msra.mxu0 0.0
  %661 = vmatprep.subr.mxu0 0.0
  %662 = vmatpush2.msra.mxu0 0.0
  %663 = vmatprep.subr.mxu0 0.0
  %664 = vmatpush2.msra.mxu0 0.0
  %665 = vmatprep.subr.mxu0 0.0
  %666 = vmatpush2.msra.mxu0 0.0
  %667 = vmatprep.subr.mxu0 0.0
  %668 = vmatpush2.msra.mxu0 0.0
  %669 = vmatprep.subr.mxu0 0.0
  %670 = vmatpush2.msra.mxu0 0.0
  %671 = vmatprep.subr.mxu0 0.0
  %672 = vmatpush2.msra.mxu0 0.0
  %673 = vmatprep.subr.mxu0 0.0
  %674 = vmatpush2.msra.mxu0 0.0
  %675 = vmatprep.subr.mxu0 0.0
  %676 = vmatpush2.msra.mxu0 0.0
  %677 = vmatprep.subr.mxu0 0.0
  %678 = vmatpush2.msra.mxu0 0.0
  %679 = vmatprep.mubr.f32.mxu0 0.0
  %680 = vmatmul.mubr.f32.gmra.mxu0 %v613
  %v681 = vpop.f32.mrf.mxu0
  %v682 = vadd.f32 %v609, %v681
  %v683 = vpop.f32.mrf.mxu0
  %v684 = vadd.f32 %v609, %v683
  %685 = vdwg.mxu0
  %686 = vmatprep.subr.mxu0 0.0
  %687 = vmatpush1.msra.mxu0 0.0
  %688 = vmatprep.subr.mxu0 0.0
  %689 = vmatpush1.msra.mxu0 0.0
  %690 = vmatprep.subr.mxu0 0.0
  %691 = vmatpush1.msra.mxu0 0.0
  %692 = vmatprep.subr.mxu0 0.0
  %693 = vmatpush1.msra.mxu0 0.0
  %694 = vmatprep.subr.mxu0 0.0
  %695 = vmatpush1.msra.mxu0 0.0
  %696 = vmatprep.subr.mxu0 0.0
  %697 = vmatpush1.msra.mxu0 0.0
  %698 = vmatprep.subr.mxu0 0.0
  %699 = vmatpush1.msra.mxu0 0.0
  %700 = vmatprep.subr.mxu0 0.0
  %701 = vmatpush1.msra.mxu0 0.0
  %702 = vmatprep.subr.mxu0 0.0
  %703 = vmatpush1.msra.mxu0 0.0
  %704 = vmatprep.subr.mxu0 0.0
  %705 = vmatpush1.msra.mxu0 0.0
  %706 = vmatprep.subr.mxu0 0.0
  %707 = vmatpush1.msra.mxu0 0.0
  %708 = vmatprep.subr.mxu0 0.0
  %709 = vmatpush1.msra.mxu0 0.0
  %710 = vmatprep.subr.mxu0 0.0
  %711 = vmatpush1.msra.mxu0 0.0
  %712 = vmatprep.subr.mxu0 0.0
  %713 = vmatpush1.msra.mxu0 0.0
  %714 = vmatprep.subr.mxu0 0.0
  %715 = vmatpush1.msra.mxu0 0.0
  %716 = vmatprep.subr.mxu0 %v601
  %717 = vmatpush1.msra.mxu0 %v600
  %718 = vmatprep.subr.mxu0 0.0
  %719 = vmatpush2.msra.mxu0 0.0
  %720 = vmatprep.subr.mxu0 0.0
  %721 = vmatpush2.msra.mxu0 0.0
  %722 = vmatprep.subr.mxu0 0.0
  %723 = vmatpush2.msra.mxu0 0.0
  %724 = vmatprep.subr.mxu0 0.0
  %725 = vmatpush2.msra.mxu0 0.0
  %726 = vmatprep.subr.mxu0 0.0
  %727 = vmatpush2.msra.mxu0 0.0
  %728 = vmatprep.subr.mxu0 0.0
  %729 = vmatpush2.msra.mxu0 0.0
  %730 = vmatprep.subr.mxu0 0.0
  %731 = vmatpush2.msra.mxu0 0.0
  %732 = vmatprep.subr.mxu0 0.0
  %733 = vmatpush2.msra.mxu0 0.0
  %734 = vmatprep.subr.mxu0 0.0
  %735 = vmatpush2.msra.mxu0 0.0
  %736 = vmatprep.subr.mxu0 0.0
  %737 = vmatpush2.msra.mxu0 0.0
  %738 = vmatprep.subr.mxu0 0.0
  %739 = vmatpush2.msra.mxu0 0.0
  %740 = vmatprep.subr.mxu0 0.0
  %741 = vmatpush2.msra.mxu0 0.0
  %742 = vmatprep.subr.mxu0 0.0
  %743 = vmatpush2.msra.mxu0 0.0
  %744 = vmatprep.subr.mxu0 0.0
  %745 = vmatpush2.msra.mxu0 0.0
  %746 = vmatprep.subr.mxu0 0.0
  %747 = vmatpush2.msra.mxu0 0.0
  %748 = vmatprep.subr.mxu0 0.0
  %749 = vmatpush2.msra.mxu0 0.0
  %750 = vmatprep.mubr.f32.mxu0 0.0
  %751 = vmatmul.mubr.f32.gmra.mxu0 %v613
  %v752 = vpop.f32.mrf.mxu0
  %v753 = vadd.f32 %v609, %v752
  %v754 = vpop.f32.mrf.mxu0
  %v755 = vadd.f32 %v609, %v754
  %756 = vdwg.mxu0
  %757 = vmatprep.subr.mxu0 0.0
  %758 = vmatpush1.msra.mxu0 0.0
  %759 = vmatprep.subr.mxu0 0.0
  %760 = vmatpush1.msra.mxu0 0.0
  %761 = vmatprep.subr.mxu0 0.0
  %762 = vmatpush1.msra.mxu0 0.0
  %763 = vmatprep.subr.mxu0 0.0
  %764 = vmatpush1.msra.mxu0 0.0
  %765 = vmatprep.subr.mxu0 0.0
  %766 = vmatpush1.msra.mxu0 0.0
  %767 = vmatprep.subr.mxu0 0.0
  %768 = vmatpush1.msra.mxu0 0.0
  %769 = vmatprep.subr.mxu0 0.0
  %770 = vmatpush1.msra.mxu0 0.0
  %771 = vmatprep.subr.mxu0 0.0
  %772 = vmatpush1.msra.mxu0 0.0
  %773 = vmatprep.subr.mxu0 0.0
  %774 = vmatpush1.msra.mxu0 0.0
  %775 = vmatprep.subr.mxu0 0.0
  %776 = vmatpush1.msra.mxu0 0.0
  %777 = vmatprep.subr.mxu0 0.0
  %778 = vmatpush1.msra.mxu0 0.0
  %779 = vmatprep.subr.mxu0 0.0
  %780 = vmatpush1.msra.mxu0 0.0
  %781 = vmatprep.subr.mxu0 0.0
  %782 = vmatpush1.msra.mxu0 0.0
  %783 = vmatprep.subr.mxu0 0.0
  %784 = vmatpush1.msra.mxu0 0.0
  %785 = vmatprep.subr.mxu0 0.0
  %786 = vmatpush1.msra.mxu0 0.0
  %787 = vmatprep.subr.mxu0 %v603
  %788 = vmatpush1.msra.mxu0 %v602
  %789 = vmatprep.subr.mxu0 0.0
  %790 = vmatpush2.msra.mxu0 0.0
  %791 = vmatprep.subr.mxu0 0.0
  %792 = vmatpush2.msra.mxu0 0.0
  %793 = vmatprep.subr.mxu0 0.0
  %794 = vmatpush2.msra.mxu0 0.0
  %795 = vmatprep.subr.mxu0 0.0
  %796 = vmatpush2.msra.mxu0 0.0
  %797 = vmatprep.subr.mxu0 0.0
  %798 = vmatpush2.msra.mxu0 0.0
  %799 = vmatprep.subr.mxu0 0.0
  %800 = vmatpush2.msra.mxu0 0.0
  %801 = vmatprep.subr.mxu0 0.0
  %802 = vmatpush2.msra.mxu0 0.0
  %803 = vmatprep.subr.mxu0 0.0
  %804 = vmatpush2.msra.mxu0 0.0
  %805 = vmatprep.subr.mxu0 0.0
  %806 = vmatpush2.msra.mxu0 0.0
  %807 = vmatprep.subr.mxu0 0.0
  %808 = vmatpush2.msra.mxu0 0.0
  %809 = vmatprep.subr.mxu0 0.0
  %810 = vmatpush2.msra.mxu0 0.0
  %811 = vmatprep.subr.mxu0 0.0
  %812 = vmatpush2.msra.mxu0 0.0
  %813 = vmatprep.subr.mxu0 0.0
  %814 = vmatpush2.msra.mxu0 0.0
  %815 = vmatprep.subr.mxu0 0.0
  %816 = vmatpush2.msra.mxu0 0.0
  %817 = vmatprep.subr.mxu0 0.0
  %818 = vmatpush2.msra.mxu0 0.0
  %819 = vmatprep.subr.mxu0 0.0
  %820 = vmatpush2.msra.mxu0 0.0
  %821 = vmatprep.mubr.f32.mxu0 0.0
  %822 = vmatmul.mubr.f32.gmra.mxu0 %v613
  %v823 = vpop.f32.mrf.mxu0
  %v824 = vadd.f32 %v609, %v823
  %v825 = vpop.f32.mrf.mxu0
  %v826 = vadd.f32 %v609, %v825
  %827 = vdwg.mxu0
  %v830 = vcombine.low %v682, %v684
  %832 = vst [vmem:[%s5] sm:$0xff] %v830
  %833 = vst [vmem:[%s5 + $0x8] sm:$0xf] %v753
  %v836 = vcombine.low %v755, %v824
  %s838 = scalar_lea.vmem %s5, 12
  %839 = vst [vmem:[%s838] sm:$0xff] %v836
  %840 = vst [vmem:[%s838 + $0x8] sm:$0xf] %v826
  // Predicated region
  $region22: #{segmentor_pallas.1} parent=0 // pred_check
    _
  $region23: #{segmentor_pallas.1} parent=0 // pred_check_branch
    %842 = sbr.rel (0) target = $region25
  $region24: #{segmentor_pallas.1} parent=0 // pred_region
    _
  $region25: #{segmentor_pallas.1} parent=0 // pred_fallthru
    _
  // Predicated region
  $region26: #{segmentor_pallas.1} parent=0 // pred_check
    _
  $region27: #{segmentor_pallas.1} parent=0 // pred_check_branch
    %844 = sbr.rel (0) target = $region29
  $region28: #{segmentor_pallas.1} parent=0 // pred_region
    _
  $region29: #{segmentor_pallas.1} parent=0 // pred_fallthru
    _

</llo_original>
